<compile_context>
chip_gen: v5e
topology: v5e:2x2
jax: 0.10.0
libtpu: 0.0.40
codegen_flags: <defaults>
</compile_context>

<pallas_src>
import functools

import jax
import jax.numpy as jnp
from jax.experimental import pallas as pl
from jax.experimental.pallas import tpu as pltpu


_MIN_PALLAS_BYTES = 128 * 1024  # below this, a fusable jnp.concatenate wins


def _round_up(v, m):
    return ((v + m - 1) // m) * m


def _sublane_pack(dtype):
    """Packed sublane count for a dtype: 8 (32-bit), 16 (bf16), 32 (int8)."""
    itemsize = jnp.dtype(dtype).itemsize
    return 8 * max(1, 4 // itemsize)


# ---------------------------------------------------------------------------
# Path A: same dtype -> pure HBM->HBM DMA concat (no VMEM staging).
# ---------------------------------------------------------------------------
def _dma_concat_kernel(dims, *refs):
    """Issue one strided HBM->HBM DMA per input into its output column slice.

    refs = (in_ref_0, ..., in_ref_{k-1}, out_ref, sem_array).  All refs live
    in HBM (memory_space=pl.ANY); column offsets are static.
    """
    in_refs = refs[:-2]
    out_ref = refs[-2]
    sems = refs[-1]
    copies = []
    off = 0
    for j, (r, d) in enumerate(zip(in_refs, dims)):
        cp = pltpu.make_async_copy(r, out_ref.at[:, off:off + d], sems.at[j])
        cp.start()
        copies.append(cp)
        off += d
    for cp in copies:
        cp.wait()


def _dma_concat(tensors, dims, total_d, out_dtype):
    B = tensors[0].shape[0]
    kernel = functools.partial(_dma_concat_kernel, tuple(dims))
    return pl.pallas_call(
        kernel,
        out_shape=jax.ShapeDtypeStruct((B, total_d), out_dtype),
        in_specs=[pl.BlockSpec(memory_space=pl.ANY) for _ in tensors],
        out_specs=pl.BlockSpec(memory_space=pl.ANY),
        scratch_shapes=[pltpu.SemaphoreType.DMA((len(tensors),))],
    )(*tensors)


# ---------------------------------------------------------------------------
# Path B: mixed dtype -> row-tiled VMEM copy with the cast fused into the
#         store (only used when a promotion is actually required).
# ---------------------------------------------------------------------------
def _cast_concat_kernel(*refs):
    """Copy each input tile into its static column slice, casting on the fly."""
    in_refs = refs[:-1]
    out_ref = refs[-1]
    off = 0
    for r in in_refs:
        d = r.shape[-1]
        out_ref[:, off:off + d] = r[...].astype(out_ref.dtype)
        off += d


def _tiled_cast_concat(tensors, dims, total_d, out_dtype, row_block=None):
    B = int(tensors[0].shape[0])
    pack = max([_sublane_pack(out_dtype)] + [_sublane_pack(t.dtype) for t in tensors])
    bytes_per_row = (
        sum(d * jnp.dtype(t.dtype).itemsize for d, t in zip(dims, tensors))
        + total_d * jnp.dtype(out_dtype).itemsize
    )

    if row_block is not None:
        tb = max(pack, (max(1, int(row_block)) // pack) * pack)
        tb = min(tb, B)
    elif B <= pack:
        tb = B  # full-dim block is always legal
    else:
        budget = 16 * 1024 * 1024  # double-buffered footprint target
        tb = budget // max(1, 2 * bytes_per_row)
        tb = min(tb, 1024)
        # Keep >= ~4 grid steps so both v7x TensorCores get rows and the
        # BlockSpec pipeline has something to overlap.
        tb = min(tb, _round_up(pl.cdiv(B, 4), pack))
        tb = max(pack, (tb // pack) * pack)
        tb = min(tb, B)

    grid_steps = pl.cdiv(B, tb)
    if grid_steps <= 1:
        # 1-step grid: no pipelining to win; let XLA fuse cast+concat instead.
        return jnp.concatenate([t.astype(out_dtype) for t in tensors], axis=-1)

    # Derive the scoped-VMEM limit from the actual double-buffered footprint.
    footprint = 2 * tb * bytes_per_row
    vmem_limit = int(min(64 * 1024 * 1024,
                         max(8 * 1024 * 1024, footprint + 4 * 1024 * 1024)))

    in_specs = [pl.BlockSpec((tb, d), lambda i: (i, 0)) for d in dims]
    out_spec = pl.BlockSpec((tb, total_d), lambda i: (i, 0))

    return pl.pallas_call(
        _cast_concat_kernel,
        out_shape=jax.ShapeDtypeStruct((B, total_d), out_dtype),
        grid=(grid_steps,),
        in_specs=in_specs,
        out_specs=out_spec,
        compiler_params=pltpu.CompilerParams(
            dimension_semantics=("parallel",),  # shard rows across TCs on v7x
            vmem_limit_bytes=vmem_limit,
        ),
    )(*tensors)


# ---------------------------------------------------------------------------
# Dispatch
# ---------------------------------------------------------------------------
def _concat_last_axis(tensors, row_block=None, min_pallas_bytes=_MIN_PALLAS_BYTES):
    dims = [int(t.shape[-1]) for t in tensors]
    total_d = sum(dims)
    B = int(tensors[0].shape[0])
    out_dtype = jnp.result_type(*tensors)  # mirror torch.cat type promotion
    out_bytes = B * total_d * jnp.dtype(out_dtype).itemsize

    if out_bytes < min_pallas_bytes:
        # Tiny copies: launch overhead dominates and XLA can fuse the concat
        # straight into the consumer.
        return jnp.concatenate([t.astype(out_dtype) for t in tensors], axis=-1)

    if all(t.dtype == out_dtype for t in tensors):
        try:
            return _dma_concat(tensors, dims, total_d, out_dtype)
        except Exception:
            # Defensive fallback: if this backend rejects direct strided
            # HBM->HBM DMA, the tiled VMEM path below always lowers.
            pass
    return _tiled_cast_concat(tensors, dims, total_d, out_dtype, row_block=row_block)


def simple_edge_forward(x, idx, detach, row_block=None,
                        min_pallas_bytes=_MIN_PALLAS_BYTES):
    """JAX/Pallas equivalent of SimpleEdge.forward.

    x:      list of jnp arrays (each rank 1 or 2 when concatenating).
    idx:    list of indices selecting which members of x participate.
    detach: bool, whether to stop gradients on the result.
    """
    if len(idx) > 1:
        selected = []
        for i, t in enumerate(x):
            if i in idx:
                if t.ndim > 2:
                    raise ValueError(
                        'Concatenate only works with Tensors of dimention 1')
                selected.append(t)

        ranks = {t.ndim for t in selected}
        if ranks == {1}:
            # Tiny vectors: fusable XLA concat beats a kernel launch.
            logits = jnp.concatenate(selected, axis=-1)
        elif ranks == {2}:
            rows = {t.shape[0] for t in selected}
            if len(rows) != 1:
                raise ValueError(
                    'Selected rank-2 tensors must share the batch dimension')
            logits = _concat_last_axis(selected, row_block=row_block,
                                       min_pallas_bytes=min_pallas_bytes)
        else:
            raise ValueError(
                'Cannot concatenate rank-1 and rank-2 tensors together')
    else:
        # Pure pass-through: no kernel, no data movement.
        logits = x[idx[0]]

    if detach:
        return jax.lax.stop_gradient(logits)
    return logits


if __name__ == "__main__":
    key = jax.random.PRNGKey(0)
    k0, k1, k2 = jax.random.split(key, 3)

    # 3 candidate tensors; 128-multiple feature dims keep offsets lane-aligned.
    B = 256
    x = [
        jax.random.normal(k0, (B, 128), dtype=jnp.float32),
        jax.random.normal(k1, (B, 256), dtype=jnp.float32),
        jax.random.normal(k2, (B, 128), dtype=jnp.float32).astype(jnp.bfloat16),
    ]

    # Path A: same-dtype selection -> direct HBM->HBM DMA concat.
    out = jax.block_until_ready(simple_edge_forward(x, [0, 1], detach=True))
    ref = jnp.concatenate([x[0], x[1]], axis=-1)
    assert out.shape == ref.shape and out.dtype == ref.dtype
    assert bool(jnp.all(out == ref))

    # Path B: mixed-dtype selection -> row-tiled VMEM kernel, cast fused in.
    out_mix = jax.block_until_ready(simple_edge_forward(x, [0, 1, 2], detach=False))
    ref_mix = jnp.concatenate([x[0], x[1], x[2].astype(jnp.float32)], axis=-1)
    assert out_mix.dtype == jnp.float32
    assert bool(jnp.all(out_mix == ref_mix))

    # Single-index pass-through path (no kernel, no copy).
    out_single = jax.block_until_ready(simple_edge_forward(x, [1], detach=False))
    assert bool(jnp.all(out_single == x[1]))

    # Rank-1 fallback path (tiny concat handled by XLA).
    v = [jax.random.normal(k0, (32,), dtype=jnp.float32),
         jax.random.normal(k1, (64,), dtype=jnp.float32)]
    out_v = jax.block_until_ready(simple_edge_forward(v, [0, 1], detach=True))
    assert out_v.shape == (96,)
    assert bool(jnp.all(out_v == jnp.concatenate(v, axis=-1)))

    # Small same-dtype selection -> jnp fallback (below the Pallas threshold).
    xs = [x[0][:8], x[1][:8]]
    out_s = jax.block_until_ready(simple_edge_forward(xs, [0, 1], detach=True))
    assert bool(jnp.all(out_s == jnp.concatenate(xs, axis=-1)))

    print("KERNEL_OK")
</pallas_src>

<mosaic_0001>
module attributes {stable_mosaic.version = 11 : i64} {
  func.func @_dma_concat_kernel(%arg0: memref<256x128xf32, #tpu.memory_space<any>>, %arg1: memref<256x256xf32, #tpu.memory_space<any>>, %arg2: memref<256x384xf32, #tpu.memory_space<any>>, %arg3: memref<2x!tpu.dma_semaphore, #tpu.memory_space<semaphore_mem>>) attributes {dimension_semantics = [], scalar_prefetch = 0 : i64, scratch_operands = 1 : i64, tpu.core_type = #tpu.core_type<tc>} {
    %c0_i32 = arith.constant 0 : i32
    %c0_i32_0 = arith.constant 0 : i32
    %c0_i32_1 = arith.constant 0 : i32
    %0 = tpu.memref_slice %arg2[%c0_i32_0, %c0_i32_1] : memref<256x384xf32, #tpu.memory_space<any>> -> memref<256x128xf32, #tpu.memory_space<any>>
    %1 = tpu.memref_slice %arg3[%c0_i32] : memref<2x!tpu.dma_semaphore, #tpu.memory_space<semaphore_mem>> -> memref<1x!tpu.dma_semaphore, #tpu.memory_space<semaphore_mem>>
    %2 = tpu.memref_squeeze %1 : memref<1x!tpu.dma_semaphore, #tpu.memory_space<semaphore_mem>> -> memref<!tpu.dma_semaphore, #tpu.memory_space<semaphore_mem>>
    tpu.enqueue_dma source(%arg0 : memref<256x128xf32, #tpu.memory_space<any>>) target(%0 : memref<256x128xf32, #tpu.memory_space<any>>) target_semaphore(%2 : memref<!tpu.dma_semaphore, #tpu.memory_space<semaphore_mem>>)
    %c1_i32 = arith.constant 1 : i32
    %c0_i32_2 = arith.constant 0 : i32
    %c128_i32 = arith.constant 128 : i32
    %3 = tpu.memref_slice %arg2[%c0_i32_2, %c128_i32] : memref<256x384xf32, #tpu.memory_space<any>> -> memref<256x256xf32, #tpu.memory_space<any>>
    %4 = tpu.memref_slice %arg3[%c1_i32] : memref<2x!tpu.dma_semaphore, #tpu.memory_space<semaphore_mem>> -> memref<1x!tpu.dma_semaphore, #tpu.memory_space<semaphore_mem>>
    %5 = tpu.memref_squeeze %4 : memref<1x!tpu.dma_semaphore, #tpu.memory_space<semaphore_mem>> -> memref<!tpu.dma_semaphore, #tpu.memory_space<semaphore_mem>>
    tpu.enqueue_dma source(%arg1 : memref<256x256xf32, #tpu.memory_space<any>>) target(%3 : memref<256x256xf32, #tpu.memory_space<any>>) target_semaphore(%5 : memref<!tpu.dma_semaphore, #tpu.memory_space<semaphore_mem>>)
    %c0_i32_3 = arith.constant 0 : i32
    %c0_i32_4 = arith.constant 0 : i32
    %c0_i32_5 = arith.constant 0 : i32
    %6 = tpu.memref_slice %arg2[%c0_i32_4, %c0_i32_5] : memref<256x384xf32, #tpu.memory_space<any>> -> memref<256x128xf32, #tpu.memory_space<any>>
    %7 = tpu.memref_slice %arg3[%c0_i32_3] : memref<2x!tpu.dma_semaphore, #tpu.memory_space<semaphore_mem>> -> memref<1x!tpu.dma_semaphore, #tpu.memory_space<semaphore_mem>>
    %8 = tpu.memref_squeeze %7 : memref<1x!tpu.dma_semaphore, #tpu.memory_space<semaphore_mem>> -> memref<!tpu.dma_semaphore, #tpu.memory_space<semaphore_mem>>
    tpu.wait_dma2 semaphore(%8 : memref<!tpu.dma_semaphore, #tpu.memory_space<semaphore_mem>>) src(%arg0 : memref<256x128xf32, #tpu.memory_space<any>>) dst(%6 : memref<256x128xf32, #tpu.memory_space<any>>)
    %c1_i32_6 = arith.constant 1 : i32
    %c0_i32_7 = arith.constant 0 : i32
    %c128_i32_8 = arith.constant 128 : i32
    %9 = tpu.memref_slice %arg2[%c0_i32_7, %c128_i32_8] : memref<256x384xf32, #tpu.memory_space<any>> -> memref<256x256xf32, #tpu.memory_space<any>>
    %10 = tpu.memref_slice %arg3[%c1_i32_6] : memref<2x!tpu.dma_semaphore, #tpu.memory_space<semaphore_mem>> -> memref<1x!tpu.dma_semaphore, #tpu.memory_space<semaphore_mem>>
    %11 = tpu.memref_squeeze %10 : memref<1x!tpu.dma_semaphore, #tpu.memory_space<semaphore_mem>> -> memref<!tpu.dma_semaphore, #tpu.memory_space<semaphore_mem>>
    tpu.wait_dma2 semaphore(%11 : memref<!tpu.dma_semaphore, #tpu.memory_space<semaphore_mem>>) src(%arg1 : memref<256x256xf32, #tpu.memory_space<any>>) dst(%9 : memref<256x256xf32, #tpu.memory_space<any>>)
    return
  }
}

module attributes {stable_mosaic.version = 11 : i64} {
  func.func @_cast_concat_kernel(%arg0: i32, %arg1: memref<64x128xf32, #tpu.memory_space<vmem>>, %arg2: memref<64x256xf32, #tpu.memory_space<vmem>>, %arg3: memref<64x384xf32, #tpu.memory_space<vmem>>) attributes {dimension_semantics = [#tpu.dimension_semantics<parallel>], iteration_bounds = array<i64: 4>, scalar_prefetch = 0 : i64, scratch_operands = 0 : i64, tpu.core_type = #tpu.core_type<tc>, window_params = [{transform_indices = @transform_0, window_bounds = array<i64: 64, 128>}, {transform_indices = @transform_1, window_bounds = array<i64: 64, 256>}, {transform_indices = @transform_2, window_bounds = array<i64: 64, 384>}]} {
    %c0 = arith.constant 0 : index
    %c0_0 = arith.constant 0 : index
    %0 = vector.load %arg1[%c0, %c0_0] : memref<64x128xf32, #tpu.memory_space<vmem>>, vector<64x128xf32>
    %c0_1 = arith.constant 0 : index
    %c0_2 = arith.constant 0 : index
    %1 = vector.load %arg3[%c0_1, %c0_2] : memref<64x384xf32, #tpu.memory_space<vmem>>, vector<64x128xf32>
    tpu.vector_store %arg3[%c0_1, %c0_2], %0 {strides = array<i32>} : memref<64x384xf32, #tpu.memory_space<vmem>>, vector<64x128xf32>,
    %c0_3 = arith.constant 0 : index
    %c0_4 = arith.constant 0 : index
    %2 = vector.load %arg2[%c0_3, %c0_4] : memref<64x256xf32, #tpu.memory_space<vmem>>, vector<64x256xf32>
    %c0_5 = arith.constant 0 : index
    %c128 = arith.constant 128 : index
    %3 = vector.load %arg3[%c0_5, %c128] : memref<64x384xf32, #tpu.memory_space<vmem>>, vector<64x256xf32>
    tpu.vector_store %arg3[%c0_5, %c128], %2 {strides = array<i32>} : memref<64x384xf32, #tpu.memory_space<vmem>>, vector<64x256xf32>,
    return
  }
  func.func @transform_0(%arg0: i32) -> (i32, i32) {
    %c0_i32 = arith.constant 0 : i32
    %c0_i32_0 = arith.constant 0 : i32
    return %arg0, %c0_i32 : i32, i32
  }
  func.func @transform_1(%arg0: i32) -> (i32, i32) {
    %c0_i32 = arith.constant 0 : i32
    %c0_i32_0 = arith.constant 0 : i32
    return %arg0, %c0_i32 : i32, i32
  }
  func.func @transform_2(%arg0: i32) -> (i32, i32) {
    %c0_i32 = arith.constant 0 : i32
    %c0_i32_0 = arith.constant 0 : i32
    return %arg0, %c0_i32 : i32, i32
  }
}

</mosaic_0001>

<llo_original>
// kernel: tpu_custom_call.1
$region0: #{tpu_custom_call.1}
  #allocation0 [shape = 'u32[]', space=smem, size = 0x4, offset = 0x4, fixed_abs, tag = 'smem constant byte address 0x4 - core index']
  #allocation1 [shape = 'u32[72,128]{1,0:T(1,128)}', space=vmem, size = 0x9000, scoped, tag = 'internal scratch']
  #allocation2 [shape = 's32[2]{0}', space=sflag, size = 0x8, scoped, tag = 'scratch operand']
  #allocation3 [shape = 's32[]', space=sflag, size = 0x4, offset = 0, fixed_abs, tag = 'sflag constant byte address 0x0 - dummy sync flag']
  #allocation5 [shape = 's32[]', space=sflag, size = 0x4, offset = 0, fixed_abs, tag = 'sflag constant byte address 0x0 - dummy sync flag']
  %s0 = inlined_call_operand.hbm [shape: f32[256,128], index: 0, kind: input, shape index: {}]
  %s1 = inlined_call_operand.hbm [shape: f32[256,256], index: 1, kind: input, shape index: {}]
  %s2 = inlined_call_operand.hbm [shape: f32[256,384], index: 2, kind: output, shape index: {}]
  %s3 = sld [smem:[#allocation0]]
  $region2: #{tpu_custom_call.1} parent=0
    _
  %s5 = ssub.s32 1, %s3
  %s6 = scalar_select 0, %s5, %s3
  $region1: #{tpu_custom_call.1} parent=0
    #allocation4 [shape = 'u32[3]{0}', space=smem, size = 0xc, scoped, tag = 'DMA stride descriptor']
    #allocation6 [shape = 'u32[3]{0}', space=smem, size = 0xc, scoped, tag = 'DMA stride descriptor']
    %s8 = sshll.u32 1, 14
    %s9 = sxor.u32 4294967295, %s8
    %s11 = sshll.u32 %s0, 4
    %s12 = int_to_ptr.hbm [resolvable:$true] %s11
    %s13 = sshll.u32 %s2, 4
    %s14 = int_to_ptr.hbm [resolvable:$true] %s13
    %18 = sst [smem:[#allocation4]] 128
    %s19 = scalar_lea.smem [#allocation4], 1
    %20 = sst [smem:[%s19]] 384
    %s21 = scalar_lea.smem [#allocation4], 2
    %22 = sst [smem:[%s21]] 8
    %24 = dma.general %s12, 4096, %s14, [#allocation2], [#allocation3], [#allocation4], 0, 0
    %s25 = scalar_lea.hbm %s2, 8
    %s26 = scalar_lea.sflag [#allocation2], 1
    %s28 = sshll.u32 1, 14
    %s29 = sxor.u32 4294967295, %s28
    %s31 = sshll.u32 %s1, 4
    %s32 = int_to_ptr.hbm [resolvable:$true] %s31
    %s33 = sshll.u32 %s25, 4
    %s34 = int_to_ptr.hbm [resolvable:$true] %s33
    %38 = sst [smem:[#allocation6]] 256
    %s39 = scalar_lea.smem [#allocation6], 1
    %40 = sst [smem:[%s39]] 384
    %s41 = scalar_lea.smem [#allocation6], 2
    %42 = sst [smem:[%s41]] 16
    %44 = dma.general %s32, 8192, %s34, %s26, [#allocation5], [#allocation6], 0, 0
    %s45 = smul.u32 8, 32
    %s46 = smul.u32 %s45, 1
    %s47 = sshll.u32 %s46, 4
    %48 = dma.done [#allocation2], %s47
    %s49 = smul.u32 %s45, 2
    %s50 = sshll.u32 %s49, 4
    %51 = dma.done %s26, %s50
  %52 = vsyncmov [#allocation2]
  %s53 = vpop.sfrf %52
  %p54 = scmp.eq.s32.totalorder %s53, 0
  %p55 = pneg %p54
  %57 = shalt.err (%p55)
  %s58 = scalar_lea.sflag [#allocation2], 1
  %59 = vsyncmov %s58
  %s60 = vpop.sfrf %59
  %p61 = scmp.eq.s32.totalorder %s60, 0
  %p62 = pneg %p61
  %64 = shalt.err (%p62)

// kernel: tpu_custom_call.1
$region0: #{tpu_custom_call.1}
  #allocation0 [shape = 'u32[]', space=smem, size = 0x4, offset = 0x4, fixed_abs, tag = 'smem constant byte address 0x4 - core index']
  #allocation1 [shape = 'u32[72,128]{1,0:T(1,128)}', space=vmem, size = 0x9000, scoped, tag = 'internal scratch']
  %s0 = inlined_call_operand.hbm [shape: f32[256,128], index: 0, kind: input, shape index: {}]
  %s1 = inlined_call_operand.hbm [shape: f32[256,256], index: 1, kind: input, shape index: {}]
  %s2 = inlined_call_operand.hbm [shape: f32[256,384], index: 2, kind: output, shape index: {}]
  %s3 = sld [smem:[#allocation0]]
  $region49: #{tpu_custom_call.1} parent=0
    _
  %s5 = ssub.s32 1, %s3
  %s6 = scalar_select 0, %s5, %s3
  $region1: #{tpu_custom_call.1} parent=0
    #allocation2 [shape = 'u8[65536]{0}', space=vmem, size = 0x10000, scoped, tag = 'input window, operand 0']
    #allocation3 [shape = 's32[2]{0}', space=sflag, size = 0x8, scoped, tag = 'scoped memory for tpu_custom_call.1']
    #allocation4 [shape = 's32[2]{0}', space=sflag, size = 0x8, scoped, tag = 'scoped memory for tpu_custom_call.1']
    #allocation5 [shape = 'u8[131072]{0}', space=vmem, size = 0x20000, scoped, tag = 'input window, operand 1']
    #allocation6 [shape = 's32[2]{0}', space=sflag, size = 0x8, scoped, tag = 'scoped memory for tpu_custom_call.1']
    #allocation7 [shape = 'u8[196608]{0}', space=vmem, size = 0x30000, scoped, tag = 'output window, operand 0']
    %7 = vsyncpa [#allocation3], 0
    %s8 = scalar_lea.sflag [#allocation3], 1
    %9 = vsyncpa %s8, 0
    %10 = vsyncpa [#allocation6], 0
    %s11 = scalar_lea.sflag [#allocation6], 1
    %12 = vsyncpa %s11, 0
    %13 = vsyncpa [#allocation4], 0
    %s14 = scalar_lea.sflag [#allocation4], 1
    %15 = vsyncpa %s14, 0
    loop: start=0, step=1, limit=6
    $region2: #{tpu_custom_call.1} parent=1 // loop_pre_header
      _
    $region3: #{tpu_custom_call.1} parent=1 // loop_header
      %s17 = sphi 0, %s21
      %p18 = scmp.ge.s32.totalorder %s17, 6
      %s27 = sphi 0, %s29
      %s30 = sphi 0, %s27
      %s31 = sphi 0, %s30
      %s47 = sphi 0, %s31
      %s53 = sphi 0, %s55
      %s56 = sphi 0, %s53
      %s57 = sphi 0, %s56
      %s73 = sphi 0, %s57
      %s79 = sphi 0, %s81
      %s82 = sphi 0, %s79
      %s83 = sphi 0, %s82
      %s99 = sphi 0, %s83
    $region4: #{tpu_custom_call.1} parent=1 // loop_header_branch
      %20 = sbr.rel (%p18) target = $region8
    $region5: #{tpu_custom_call.1} parent=1 // loop_body
      %s22 = ssub.s32 %s17, 1
      %s23 = ssub.s32 %s17, 2
      %s24 = sadd.s32 %s17, 1
      %s25 = ssub.s32 %s17, %s24
      %p26 = scmp.eq.s32.totalorder %s25, 0
      %s28 = sadd.s32 %s27, 1
      %s29 = scalar_select %p26, %s27, %s28
      %p32 = pneg %p26
      %p33 = scmp.eq.s32.totalorder %s17, 3
      %p34 = por %p32, %p33
      %p35 = scmp.ne.s32.totalorder %s27, %s30
      %p36 = scmp.eq.s32.totalorder %s17, 0
      %p37 = por %p35, %p36
      %p38 = scmp.ne.s32.totalorder %s27, %s30
      %p39 = scmp.eq.s32.totalorder %s22, 3
      %p40 = por %p38, %p39
      %p41 = scmp.ne.s32.totalorder %s30, %s31
      %p42 = scmp.eq.s32.totalorder %s22, 0
      %p43 = por %p41, %p42
      %p44 = scmp.ne.s32.totalorder %s30, %s31
      %p45 = scmp.eq.s32.totalorder %s23, 3
      %p46 = por %p44, %p45
      %p48 = scmp.ne.s32.totalorder %s31, %s47
      %p49 = scmp.eq.s32.totalorder %s23, 0
      %p50 = por %p48, %p49
      %s51 = ssub.s32 %s17, %s24
      %p52 = scmp.eq.s32.totalorder %s51, 0
      %s54 = sadd.s32 %s53, 1
      %s55 = scalar_select %p52, %s53, %s54
      %p58 = pneg %p52
      %p59 = scmp.eq.s32.totalorder %s17, 3
      %p60 = por %p58, %p59
      %p61 = scmp.ne.s32.totalorder %s53, %s56
      %p62 = scmp.eq.s32.totalorder %s17, 0
      %p63 = por %p61, %p62
      %p64 = scmp.ne.s32.totalorder %s53, %s56
      %p65 = scmp.eq.s32.totalorder %s22, 3
      %p66 = por %p64, %p65
      %p67 = scmp.ne.s32.totalorder %s56, %s57
      %p68 = scmp.eq.s32.totalorder %s22, 0
      %p69 = por %p67, %p68
      %p70 = scmp.ne.s32.totalorder %s56, %s57
      %p71 = scmp.eq.s32.totalorder %s23, 3
      %p72 = por %p70, %p71
      %p74 = scmp.ne.s32.totalorder %s57, %s73
      %p75 = scmp.eq.s32.totalorder %s23, 0
      %p76 = por %p74, %p75
      %s77 = ssub.s32 %s17, %s24
      %p78 = scmp.eq.s32.totalorder %s77, 0
      %s80 = sadd.s32 %s79, 1
      %s81 = scalar_select %p78, %s79, %s80
      %p84 = pneg %p78
      %p85 = scmp.eq.s32.totalorder %s17, 3
      %p86 = por %p84, %p85
      %p87 = scmp.ne.s32.totalorder %s79, %s82
      %p88 = scmp.eq.s32.totalorder %s17, 0
      %p89 = por %p87, %p88
      %p90 = scmp.ne.s32.totalorder %s79, %s82
      %p91 = scmp.eq.s32.totalorder %s22, 3
      %p92 = por %p90, %p91
      %p93 = scmp.ne.s32.totalorder %s82, %s83
      %p94 = scmp.eq.s32.totalorder %s22, 0
      %p95 = por %p93, %p94
      %p96 = scmp.ne.s32.totalorder %s82, %s83
      %p97 = scmp.eq.s32.totalorder %s23, 3
      %p98 = por %p96, %p97
      %p100 = scmp.ne.s32.totalorder %s83, %s99
      %p101 = scmp.eq.s32.totalorder %s23, 0
      %p102 = por %p100, %p101
      %p103 = scmp.le.s32.totalorder 1, %s17
      %p104 = scmp.lt.s32.totalorder %s17, 5
      %p105 = pnand %p103, %p104
      %p106 = pneg %p105
      // Predicated region
      $region9: #{tpu_custom_call.1} parent=5 // pred_check
        _
      $region10: #{tpu_custom_call.1} parent=5 // pred_check_branch
        %108 = sbr.rel (%p105) target = $region12
      $region11: #{tpu_custom_call.1} parent=5 // pred_region
        %s109 = ssub.s32 %s17, 1
      $region12: #{tpu_custom_call.1} parent=5 // pred_fallthru
        _
      %p110 = scmp.lt.s32.totalorder %s17, 4
      // Predicated region
      $region13: #{tpu_custom_call.1} parent=5 // pred_check
        %p111 = pneg %p110
      $region14: #{tpu_custom_call.1} parent=5 // pred_check_branch
        %113 = sbr.rel (%p111) target = $region16
      $region15: #{tpu_custom_call.1} parent=5 // pred_region
        // Predicated region
        $region17: #{tpu_custom_call.1} parent=15 // pred_check
          %p114 = pneg %p37
        $region18: #{tpu_custom_call.1} parent=15 // pred_check_branch
          %116 = sbr.rel (%p114) target = $region20
        $region19: #{tpu_custom_call.1} parent=15 // pred_region
          %s117 = sand.u32 %s27, 1
          %s118 = scalar_lea.sflag [#allocation3], %s117
          %s119 = sand.u32 %s27, 1
          %s120 = smul.addr %s119, 64
          %s121 = scalar_lea.vmem [#allocation2], %s120
          %s122 = smul.u32 8, %s17
          %124 = vsyncadd %s118, 0
          %s125 = smul.addr %s122, 8
          %s126 = scalar_lea.hbm %s0, %s125
          %s127 = sshll.u32 %s126, 4
          %s128 = int_to_ptr.hbm [resolvable:$true] %s127
          %s129 = sshll.u32 %s121, 4
          %s130 = int_to_ptr.vmem [resolvable:$true] %s129
          %135 = dma.hbm_to_vmem [thread:$0]  %s128, 1024, %s130, %s118, 128, 128, 8
        $region20: #{tpu_custom_call.1} parent=15 // pred_fallthru
          _
        // Predicated region
        $region21: #{tpu_custom_call.1} parent=15 // pred_check
          %p136 = pneg %p63
        $region22: #{tpu_custom_call.1} parent=15 // pred_check_branch
          %138 = sbr.rel (%p136) target = $region24
        $region23: #{tpu_custom_call.1} parent=15 // pred_region
          %s139 = sand.u32 %s53, 1
          %s140 = scalar_lea.sflag [#allocation6], %s139
          %s141 = sand.u32 %s53, 1
          %s142 = smul.addr %s141, 128
          %s143 = scalar_lea.vmem [#allocation5], %s142
          %s144 = smul.u32 8, %s17
          %146 = vsyncadd %s140, 0
          %s147 = smul.addr %s144, 2
          %s148 = smul.addr %s147, 8
          %s149 = scalar_lea.hbm %s1, %s148
          %s150 = sshll.u32 %s149, 4
          %s151 = int_to_ptr.hbm [resolvable:$true] %s150
          %s152 = sshll.u32 %s143, 4
          %s153 = int_to_ptr.vmem [resolvable:$true] %s152
          %158 = dma.hbm_to_vmem [thread:$0]  %s151, 2048, %s153, %s140, 256, 256, 16
        $region24: #{tpu_custom_call.1} parent=15 // pred_fallthru
          _
      $region16: #{tpu_custom_call.1} parent=5 // pred_fallthru
        _
      %p159 = scmp.le.s32.totalorder 1, %s17
      %p160 = scmp.lt.s32.totalorder %s17, 5
      %p161 = pnand %p159, %p160
      %p162 = pneg %p161
      // Predicated region
      $region25: #{tpu_custom_call.1} parent=5 // pred_check
        _
      $region26: #{tpu_custom_call.1} parent=5 // pred_check_branch
        %164 = sbr.rel (%p161) target = $region28
      $region27: #{tpu_custom_call.1} parent=5 // pred_region
        %s165 = ssub.s32 %s17, 1
        %s166 = sand.u32 %s30, 1
        %s167 = scalar_lea.sflag [#allocation3], %s166
        %s168 = sand.u32 %s30, 1
        %s169 = smul.addr %s168, 64
        %s170 = scalar_lea.vmem [#allocation2], %s169
        // Predicated region
        $region29: #{tpu_custom_call.1} parent=27 // pred_check
          %p171 = pneg %p43
        $region30: #{tpu_custom_call.1} parent=27 // pred_check_branch
          %173 = sbr.rel (%p171) target = $region32
        $region31: #{tpu_custom_call.1} parent=27 // pred_region
          %175 = dma.done %s167, 1024
        $region32: #{tpu_custom_call.1} parent=27 // pred_fallthru
          _
        %s176 = sand.u32 %s56, 1
        %s177 = scalar_lea.sflag [#allocation6], %s176
        %s178 = sand.u32 %s56, 1
        %s179 = smul.addr %s178, 128
        %s180 = scalar_lea.vmem [#allocation5], %s179
        // Predicated region
        $region33: #{tpu_custom_call.1} parent=27 // pred_check
          %p181 = pneg %p69
        $region34: #{tpu_custom_call.1} parent=27 // pred_check_branch
          %183 = sbr.rel (%p181) target = $region36
        $region35: #{tpu_custom_call.1} parent=27 // pred_region
          %185 = dma.done %s177, 2048
        $region36: #{tpu_custom_call.1} parent=27 // pred_fallthru
          _
        %s186 = sand.u32 %s30, 1
        %s187 = scalar_lea.sflag [#allocation3], %s186
        %s188 = sand.u32 %s30, 1
        %s189 = smul.addr %s188, 64
        %s190 = scalar_lea.vmem [#allocation2], %s189
        %p191 = pneg %p43
        %p192 = pneg %p40
        %s193 = sand.u32 %s56, 1
        %s194 = scalar_lea.sflag [#allocation6], %s193
        %s195 = sand.u32 %s56, 1
        %s196 = smul.addr %s195, 128
        %s197 = scalar_lea.vmem [#allocation5], %s196
        %p198 = pneg %p69
        %p199 = pneg %p66
        %p200 = pneg %p95
        %p201 = pneg %p92
        %s202 = sand.u32 %s82, 1
        %s203 = scalar_lea.sflag [#allocation4], %s202
        %s204 = sand.u32 %s82, 1
        %s205 = smul.addr %s204, 192
        %s206 = scalar_lea.vmem [#allocation7], %s205
        %s207 = smul.u32 8, %s22
        %s208 = smul.u32 8, %s22
        %s209 = smul.u32 8, %s22
        %v210 = vld [vmem:[%s170] sm:$0xff]
        %v211 = vld [vmem:[%s170 + $0x8] sm:$0xff]
        %v212 = vld [vmem:[%s170 + $0x10] sm:$0xff]
        %v213 = vld [vmem:[%s170 + $0x18] sm:$0xff]
        %v214 = vld [vmem:[%s170 + $0x20] sm:$0xff]
        %v215 = vld [vmem:[%s170 + $0x28] sm:$0xff]
        %v216 = vld [vmem:[%s170 + $0x30] sm:$0xff]
        %v217 = vld [vmem:[%s170 + $0x38] sm:$0xff]
        %218 = vst [vmem:[%s206] sm:$0xff] %v210
        %219 = vst [vmem:[%s206 + $0x18] sm:$0xff] %v211
        %220 = vst [vmem:[%s206 + $0x30] sm:$0xff] %v212
        %221 = vst [vmem:[%s206 + $0x48] sm:$0xff] %v213
        %222 = vst [vmem:[%s206 + $0x60] sm:$0xff] %v214
        %223 = vst [vmem:[%s206 + $0x78] sm:$0xff] %v215
        %224 = vst [vmem:[%s206 + $0x90] sm:$0xff] %v216
        %225 = vst [vmem:[%s206 + $0xa8] sm:$0xff] %v217
        %v226 = vld [vmem:[%s180] sm:$0xff]
        %v227 = vld [vmem:[%s180 + $0x8] sm:$0xff]
        %v228 = vld [vmem:[%s180 + $0x10] sm:$0xff]
        %v229 = vld [vmem:[%s180 + $0x18] sm:$0xff]
        %v230 = vld [vmem:[%s180 + $0x20] sm:$0xff]
        %v231 = vld [vmem:[%s180 + $0x28] sm:$0xff]
        %v232 = vld [vmem:[%s180 + $0x30] sm:$0xff]
        %v233 = vld [vmem:[%s180 + $0x38] sm:$0xff]
        %v234 = vld [vmem:[%s180 + $0x40] sm:$0xff]
        %v235 = vld [vmem:[%s180 + $0x48] sm:$0xff]
        %v236 = vld [vmem:[%s180 + $0x50] sm:$0xff]
        %v237 = vld [vmem:[%s180 + $0x58] sm:$0xff]
        %v238 = vld [vmem:[%s180 + $0x60] sm:$0xff]
        %v239 = vld [vmem:[%s180 + $0x68] sm:$0xff]
        %v240 = vld [vmem:[%s180 + $0x70] sm:$0xff]
        %v241 = vld [vmem:[%s180 + $0x78] sm:$0xff]
        %242 = vst [vmem:[%s206 + $0x8] sm:$0xff] %v226
        %243 = vst [vmem:[%s206 + $0x10] sm:$0xff] %v227
        %244 = vst [vmem:[%s206 + $0x20] sm:$0xff] %v228
        %245 = vst [vmem:[%s206 + $0x28] sm:$0xff] %v229
        %246 = vst [vmem:[%s206 + $0x38] sm:$0xff] %v230
        %247 = vst [vmem:[%s206 + $0x40] sm:$0xff] %v231
        %248 = vst [vmem:[%s206 + $0x50] sm:$0xff] %v232
        %249 = vst [vmem:[%s206 + $0x58] sm:$0xff] %v233
        %250 = vst [vmem:[%s206 + $0x68] sm:$0xff] %v234
        %251 = vst [vmem:[%s206 + $0x70] sm:$0xff] %v235
        %252 = vst [vmem:[%s206 + $0x80] sm:$0xff] %v236
        %253 = vst [vmem:[%s206 + $0x88] sm:$0xff] %v237
        %254 = vst [vmem:[%s206 + $0x98] sm:$0xff] %v238
        %255 = vst [vmem:[%s206 + $0xa0] sm:$0xff] %v239
        %256 = vst [vmem:[%s206 + $0xb0] sm:$0xff] %v240
        %257 = vst [vmem:[%s206 + $0xb8] sm:$0xff] %v241
        %s258 = sand.u32 %s82, 1
        %s259 = scalar_lea.sflag [#allocation4], %s258
        %s260 = sand.u32 %s82, 1
        %s261 = smul.addr %s260, 192
        %s262 = scalar_lea.vmem [#allocation7], %s261
        // Predicated region
        $region37: #{tpu_custom_call.1} parent=27 // pred_check
          %p263 = pneg %p92
        $region38: #{tpu_custom_call.1} parent=27 // pred_check_branch
          %265 = sbr.rel (%p263) target = $region40
        $region39: #{tpu_custom_call.1} parent=27 // pred_region
          %s266 = smul.u32 8, %s22
          %268 = vsyncadd %s259, 0
          %s269 = smul.addr %s266, 3
          %s270 = smul.addr %s269, 8
          %s271 = scalar_lea.hbm %s2, %s270
          %s272 = sshll.u32 %s262, 4
          %s273 = int_to_ptr.vmem [resolvable:$true] %s272
          %s274 = sshll.u32 %s271, 4
          %s275 = int_to_ptr.hbm [resolvable:$true] %s274
          %280 = dma.vmem_to_hbm [thread:$0]  %s273, 3072, %s275, %s259, 384, 384, 24
        $region40: #{tpu_custom_call.1} parent=27 // pred_fallthru
          _
      $region28: #{tpu_custom_call.1} parent=5 // pred_fallthru
        _
      %p281 = scmp.le.s32.totalorder 2, %s17
      // Predicated region
      $region41: #{tpu_custom_call.1} parent=5 // pred_check
        %p282 = pneg %p281
      $region42: #{tpu_custom_call.1} parent=5 // pred_check_branch
        %284 = sbr.rel (%p282) target = $region44
      $region43: #{tpu_custom_call.1} parent=5 // pred_region
        %s285 = ssub.s32 %s17, 2
        // Predicated region
        $region45: #{tpu_custom_call.1} parent=43 // pred_check
          %p286 = pneg %p98
        $region46: #{tpu_custom_call.1} parent=43 // pred_check_branch
          %288 = sbr.rel (%p286) target = $region48
        $region47: #{tpu_custom_call.1} parent=43 // pred_region
          %s289 = sand.u32 %s83, 1
          %s290 = scalar_lea.sflag [#allocation4], %s289
          %s291 = sand.u32 %s83, 1
          %s292 = smul.addr %s291, 192
          %s293 = scalar_lea.vmem [#allocation7], %s292
          %295 = dma.done %s290, 3072
        $region48: #{tpu_custom_call.1} parent=43 // pred_fallthru
          _
      $region44: #{tpu_custom_call.1} parent=5 // pred_fallthru
        _
    $region6: #{tpu_custom_call.1} parent=1 // loop_footer
      %s21 = sadd.s32 1, %s17
    $region7: #{tpu_custom_call.1} parent=1 // loop_footer_branch
      %16 = sbr.rel target = $region3
    $region8: #{tpu_custom_call.1} parent=1 // loop_exit
      _
    %296 = vsyncpa [#allocation3], 1
    %s297 = scalar_lea.sflag [#allocation3], 1
    %298 = vsyncpa %s297, 1
    %299 = vsyncpa [#allocation6], 1
    %s300 = scalar_lea.sflag [#allocation6], 1
    %301 = vsyncpa %s300, 1
    %302 = vsyncpa [#allocation4], 1
    %s303 = scalar_lea.sflag [#allocation4], 1
    %304 = vsyncpa %s303, 1

</llo_original>
